<compile_context>
chip_gen: v7x
topology: tpu7x:2x2x1
jax: 0.10.0
libtpu: 0.0.40
codegen_flags: <defaults>
</compile_context>

<pallas_src>
import jax
import jax.numpy as jnp
from jax.experimental import pallas as pl
from jax.experimental.pallas import tpu as pltpu


def _swish_kernel(x_ref, o_ref):
    # silu(x) = x * sigmoid(x); compute in f32 for accuracy, cast back.
    xf = x_ref[...].astype(jnp.float32)
    o_ref[...] = (xf * jax.nn.sigmoid(xf)).astype(o_ref.dtype)


# Minimum sublane multiple per element byte-width (packed min tile is
# (sub, 128): f32 -> (8,128), bf16/f16 -> (16,128), int8/fp8 -> (32,128)).
_SUBLANE_BY_ITEMSIZE = {4: 8, 2: 16, 1: 32}
_LANES = 128
_SPLIT_MIN_BYTES = 4 * 1024 * 1024  # only multi-step single-block tensors above this


def _tpu_defaults():
    """Generation-aware (target_block_bytes, vmem_limit_bytes)."""
    try:
        vmem_cap = int(pltpu.get_tpu_info().vmem_capacity_bytes)
    except Exception:
        vmem_cap = 64 * 1024 * 1024  # conservative fallback: v7x per-TC VMEM
    if vmem_cap >= 96 * 1024 * 1024:
        # v5e / v6e: 128 MiB VMEM -> bigger blocks, higher scoped limit.
        return 12 * 1024 * 1024, 80 * 1024 * 1024
    # v7x: 64 MiB per TC -> keep in+out double-buffered footprint (4*block)
    # around 40 MiB, scoped limit 48 MiB with headroom for Mosaic scratch.
    return 10 * 1024 * 1024, 48 * 1024 * 1024


def swish(x: jax.Array, *, target_block_bytes: int | None = None,
          donate: bool = False) -> jax.Array:
    """Elementwise SiLU via a Pallas TPU kernel (any floating shape/dtype)."""
    orig_shape = x.shape
    orig_dtype = x.dtype
    if not jnp.issubdtype(orig_dtype, jnp.floating):
        raise TypeError(f"swish/silu requires a floating-point input, got {orig_dtype}")
    n = x.size
    if n == 0:
        return x

    itemsize = jnp.dtype(orig_dtype).itemsize
    sub = _SUBLANE_BY_ITEMSIZE.get(itemsize, 8)

    block_bytes, vmem_limit = _tpu_defaults()
    if target_block_bytes is not None:
        block_bytes = target_block_bytes

    # ---- Lane-dense 2-D view --------------------------------------------
    # Zero-copy whenever n is a multiple of 128 (cols % 128 == 0 is the only
    # hard requirement; block rows are a multiple of `sub` and Pallas masks
    # the partial last row-block, so rows need no alignment).  Only when
    # n % 128 != 0 do we pad by < 128 elements and slice the result back.
    pad = (-n) % _LANES
    x_flat = x.reshape(-1)
    if pad:
        x_flat = jnp.pad(x_flat, (0, pad))
    total = n + pad

    cols = _LANES
    for k in (8, 4, 2):
        if total % (_LANES * k) == 0:
            cols = _LANES * k
            break
    rows = total // cols

    # Block rows: ~block_bytes per block, multiple of the sublane requirement.
    br = max(sub, ((block_bytes // (cols * itemsize)) // sub) * sub)
    if br >= rows:
        # Whole tensor fits in one block.
        if total * itemsize >= _SPLIT_MIN_BYTES and rows >= 4 * sub:
            # >= 4 grid steps so both v7x TensorCores get >= 2 pipelined steps
            # each; skipped for small tensors where per-step overhead dominates.
            quarter = -(-rows // 4)
            br = ((quarter + sub - 1) // sub) * sub
        else:
            br = rows
    grid = (pl.cdiv(rows, br),)

    x2d = x_flat.reshape(rows, cols)

    # Advisory cost: mem-bound elementwise op (read + write), one exp per elem.
    cost = pl.CostEstimate(
        flops=4 * total,
        transcendentals=total,
        bytes_accessed=2 * total * itemsize,
    )

    # Alias the pallas input buffer into the output:
    #  * padded branch: the padded flat array is a fresh intermediate -> always
    #    safe; removes one full output HBM allocation.
    #  * zero-copy branch: only when the caller explicitly donates x.
    io_aliases = {0: 0} if (pad or donate) else {}

    out2d = pl.pallas_call(
        _swish_kernel,
        out_shape=jax.ShapeDtypeStruct((rows, cols), orig_dtype),
        grid_spec=pltpu.PrefetchScalarGridSpec(
            num_scalar_prefetch=0,
            grid=grid,
            in_specs=[pl.BlockSpec((br, cols), lambda i: (i, 0))],
            out_specs=pl.BlockSpec((br, cols), lambda i: (i, 0)),
        ),
        compiler_params=pltpu.CompilerParams(
            # NOTE: on v7x, verify with a trace that this 1-D "parallel" grid
            # is sharded across both TensorCores; if not, add an explicit
            # leading core axis (pltpu.CORE_PARALLEL) and split rows manually.
            dimension_semantics=("parallel",),
            vmem_limit_bytes=vmem_limit,
        ),
        cost_estimate=cost,
        input_output_aliases=io_aliases,
    )(x2d)

    out_flat = out2d.reshape(-1)
    if pad:
        out_flat = out_flat[:n]
    return out_flat.reshape(orig_shape)


if __name__ == "__main__":
    key = jax.random.PRNGKey(0)
    k1, k2, k3, k4 = jax.random.split(key, 4)

    def ref(v):
        return v * jax.nn.sigmoid(v)

    # 1) Typical NCHW activation, f32, aligned zero-copy path.
    x = jax.random.normal(k1, (2, 4, 16, 16), dtype=jnp.float32)
    y = jax.block_until_ready(swish(x))
    assert y.shape == x.shape and y.dtype == x.dtype
    assert jnp.allclose(y, ref(x), atol=1e-6, rtol=1e-6)

    # 1b) Same data, explicitly donated private copy (exercises aliasing on
    #     the zero-copy branch).
    x_d = jnp.array(x)
    y_d = jax.block_until_ready(swish(x_d, donate=True))
    assert jnp.allclose(y_d, ref(x), atol=1e-6, rtol=1e-6)

    # 2) Awkward shape (n % 128 != 0): pad + masked-tail + aliased-intermediate path.
    x_odd = jax.random.normal(k2, (3, 5, 7), dtype=jnp.float32)
    y_odd = jax.block_until_ready(swish(x_odd))
    assert jnp.allclose(y_odd, ref(x_odd), atol=1e-6, rtol=1e-6)

    # 3) bf16 input (16-sublane tiling), aligned path.
    x_bf = jax.random.normal(k3, (2, 4, 16, 16), dtype=jnp.bfloat16)
    y_bf = jax.block_until_ready(swish(x_bf))
    assert y_bf.dtype == jnp.bfloat16
    assert jnp.allclose(y_bf.astype(jnp.float32), ref(x_bf.astype(jnp.float32)),
                        atol=2e-2, rtol=2e-2)

    # 4) Multi-block grid with a masked partial last block (small forced tile).
    x_mb = jax.random.normal(k4, (21, 32, 32), dtype=jnp.float32)
    y_mb = jax.block_until_ready(swish(x_mb, target_block_bytes=16 * 1024))
    assert jnp.allclose(y_mb, ref(x_mb), atol=1e-6, rtol=1e-6)

    print("KERNEL_OK")
</pallas_src>

<mosaic_0001>
module attributes {stable_mosaic.version = 11 : i64} {
  func.func @_swish_kernel(%arg0: i32, %arg1: memref<2x1024xf32, #tpu.memory_space<vmem>>, %arg2: memref<2x1024xf32, #tpu.memory_space<vmem>>) attributes {dimension_semantics = [#tpu.dimension_semantics<parallel>], iteration_bounds = array<i64: 1>, scalar_prefetch = 0 : i64, scratch_operands = 0 : i64, tpu.core_type = #tpu.core_type<tc>, window_params = [{transform_indices = @transform_0, window_bounds = array<i64: 2, 1024>}, {transform_indices = @transform_1, window_bounds = array<i64: 2, 1024>}]} {
    %c0 = arith.constant 0 : index
    %c0_0 = arith.constant 0 : index
    %0 = vector.load %arg1[%c0, %c0_0] : memref<2x1024xf32, #tpu.memory_space<vmem>>, vector<2x1024xf32>
    %1 = arith.negf %0 : vector<2x1024xf32>
    %2 = math.exp %1 : vector<2x1024xf32>
    %cst = arith.constant 1.000000e+00 : f32
    %3 = vector.broadcast %cst : f32 to vector<2x1024xf32>
    %4 = arith.addf %3, %2 : vector<2x1024xf32>
    %5 = arith.divf %3, %4 : vector<2x1024xf32>
    %6 = arith.mulf %0, %5 : vector<2x1024xf32>
    %c0_1 = arith.constant 0 : index
    %c0_2 = arith.constant 0 : index
    %7 = vector.load %arg2[%c0_1, %c0_2] : memref<2x1024xf32, #tpu.memory_space<vmem>>, vector<2x1024xf32>
    tpu.vector_store %arg2[%c0_1, %c0_2], %6 {strides = array<i32>} : memref<2x1024xf32, #tpu.memory_space<vmem>>, vector<2x1024xf32>,
    return
  }
  func.func @transform_0(%arg0: i32) -> (i32, i32) {
    %c0_i32 = arith.constant 0 : i32
    %c0_i32_0 = arith.constant 0 : i32
    return %arg0, %c0_i32 : i32, i32
  }
  func.func @transform_1(%arg0: i32) -> (i32, i32) {
    %c0_i32 = arith.constant 0 : i32
    %c0_i32_0 = arith.constant 0 : i32
    return %arg0, %c0_i32 : i32, i32
  }
}

</mosaic_0001>

<llo_original>
// kernel: tpu_custom_call.1
$region0: #{tpu_custom_call.1}
  #allocation0 [shape = 'u32[]', space=smem, size = 0x4, offset = 0x4, fixed_abs, tag = 'smem constant byte address 0x4 - core index']
  #allocation1 [shape = 'u32[144,128]{1,0:T(1,128)}', space=vmem, size = 0x12000, scoped, tag = 'internal scratch']
  %s0 = inlined_call_operand.hbm [shape: f32[2,1024], index: 0, kind: input, shape index: {}]
  %s1 = inlined_call_operand.hbm [shape: f32[2,1024], index: 1, kind: output, shape index: {}]
  %s2 = sld [smem:[#allocation0]]
  $region18: #{tpu_custom_call.1} parent=0
    _
  %s4 = ssub.s32 1, %s2
  %s5 = scalar_select 0, %s4, %s2
  $region1: #{tpu_custom_call.1} parent=0
    #allocation2 [shape = 'u8[8192]{0}', space=vmem, size = 0x2000, scoped, tag = 'input window, operand 0, single buffered']
    #allocation3 [shape = 's32[1]{0}', space=sflag, size = 0x4, scoped, tag = 'scoped memory for tpu_custom_call.1']
    #allocation4 [shape = 's32[1]{0}', space=sflag, size = 0x4, scoped, tag = 'scoped memory for tpu_custom_call.1']
    #allocation5 [shape = 'u8[8192]{0}', space=vmem, size = 0x2000, scoped, tag = 'output window, operand 0, single buffered']
    %6 = vsyncpa [#allocation3], 0
    %7 = vsyncpa [#allocation4], 0
    // Predicated region
    $region2: #{tpu_custom_call.1} parent=1 // pred_check
      _
    $region3: #{tpu_custom_call.1} parent=1 // pred_check_branch
      %9 = sbr.rel (0) target = $region5
    $region4: #{tpu_custom_call.1} parent=1 // pred_region
      %s11 = ssub.s32 256, 256
      %12 = vsyncadd [#allocation3], %s11
      %s14 = sshll.u32 [#allocation2], 4
      %s15 = int_to_ptr.vmem [resolvable:$true] %s14
      %17 = dma.hbm_to_vmem [thread:$0]  %s0, 256, %s15, [#allocation3]
    $region5: #{tpu_custom_call.1} parent=1 // pred_fallthru
      _
    // Predicated region
    $region6: #{tpu_custom_call.1} parent=1 // pred_check
      _
    $region7: #{tpu_custom_call.1} parent=1 // pred_check_branch
      %19 = sbr.rel (0) target = $region9
    $region8: #{tpu_custom_call.1} parent=1 // pred_region
      %20 = dma.done [#allocation3], 256
    $region9: #{tpu_custom_call.1} parent=1 // pred_fallthru
      _
    %v21 = vld [vmem:[#allocation2] sm:$0xff]
    %v22 = vld [vmem:[#allocation2 + $0x8] sm:$0xff]
    %v23 = vxor.u32 %v21, 2147483648
    %v24 = vxor.u32 %v22, 2147483648
    %v25 = vmul.f32 %v23, 1.442695
    %v26 = vpow.pop %v25
    %v27 = vmul.f32 %v24, 1.442695
    %v28 = vpow.pop %v27
    %v29 = vadd.f32 %v26, 1.0
    %v30 = vadd.f32 %v28, 1.0
    %v31 = vrcp.pop %v29
    %v32 = vmul.f32 1.0, %v31
    %v33 = vrcp.pop %v30
    %v34 = vmul.f32 1.0, %v33
    %v35 = vmul.f32 %v21, %v32
    %v36 = vmul.f32 %v22, %v34
    %37 = vst [vmem:[#allocation5] sm:$0xff] %v35
    %38 = vst [vmem:[#allocation5 + $0x8] sm:$0xff] %v36
    // Predicated region
    $region10: #{tpu_custom_call.1} parent=1 // pred_check
      _
    $region11: #{tpu_custom_call.1} parent=1 // pred_check_branch
      %40 = sbr.rel (0) target = $region13
    $region12: #{tpu_custom_call.1} parent=1 // pred_region
      %s42 = ssub.s32 256, 256
      %43 = vsyncadd [#allocation4], %s42
      %s45 = sshll.u32 [#allocation5], 4
      %s46 = int_to_ptr.vmem [resolvable:$true] %s45
      %48 = dma.vmem_to_hbm [thread:$0]  %s46, 256, %s1, [#allocation4]
    $region13: #{tpu_custom_call.1} parent=1 // pred_fallthru
      _
    // Predicated region
    $region14: #{tpu_custom_call.1} parent=1 // pred_check
      _
    $region15: #{tpu_custom_call.1} parent=1 // pred_check_branch
      %50 = sbr.rel (0) target = $region17
    $region16: #{tpu_custom_call.1} parent=1 // pred_region
      %51 = dma.done [#allocation4], 256
    $region17: #{tpu_custom_call.1} parent=1 // pred_fallthru
      _
    %52 = vsyncpa [#allocation3], 1
    %53 = vsyncpa [#allocation4], 1

</llo_original>
